<compile_context>
chip_gen: v7x
topology: tpu7x:2x2x1
jax: 0.10.0
libtpu: 0.0.40
codegen_flags: <defaults>
</compile_context>

<pallas_src>
import math
import numpy as np
import jax
import jax.numpy as jnp
from jax import lax
from jax.experimental import pallas as pl
from jax.experimental.pallas import tpu as pltpu

# ---------------- model hyper-parameters (small but structurally faithful) -------------
EMBED_DIM = 32            # embed_dim
PATCH = 4                 # patch_size
T_HIST = 2                # max_history_size (== T of the batch)
LATENT_LEVELS = 4         # latent_levels
N_LAT = LATENT_LEVELS - 1
NUM_HEADS = 4
HEAD_DIM = 8
INNER = NUM_HEADS * HEAD_DIM
DEPTH = 2
MLP_RATIO = 4.0
DH = int(EMBED_DIM * MLP_RATIO)
LN_EPS = 1e-5             # perceiver_ln_eps and nn.LayerNorm default eps
NEG_INF = -1e30

SURF_VARS = ("2t", "10u", "10v")
STATIC_VARS = ("lsm", "z")
ATMOS_VARS = ("t", "u", "v", "q")
ATMOS_LEVELS = (100.0, 250.0, 500.0, 850.0)


# ---------------------------- in-kernel math helpers -----------------------------------
def _gelu(x):
    # TODO(synk): PyTorch nn.GELU defaults to the exact erf formulation; the tanh
    # approximation is used here for Mosaic-safe lowering (~1e-3 deviation).
    c = math.sqrt(2.0 / math.pi)
    return 0.5 * x * (1.0 + jnp.tanh(c * (x + 0.044715 * x * x * x)))


def _layernorm(x, gamma, beta, eps):
    mu = jnp.mean(x, axis=-1, keepdims=True)
    var = jnp.mean((x - mu) ** 2, axis=-1, keepdims=True)
    return (x - mu) * jax.lax.rsqrt(var + eps) * gamma + beta


def _full_spec(shape):
    """BlockSpec for an input that is resident (constant block index) across the grid."""
    nd = len(shape)
    return pl.BlockSpec(shape, lambda i, _nd=nd: (0,) * _nd)


# ------------------------------- Pallas kernels ----------------------------------------
def _surf_kernel(ps_ref, pw_ref, pb_ref, w1_ref, b1_ref, w2_ref, b2_ref, g_ref, be_ref,
                 o_ref):
    # Fused surface path: conv3d-as-matmul patch embed (+ patch bias + surf level
    # encoding, folded into pb) -> residual MLP + LayerNorm:
    #   x' = patch_embed(ps) + b + surf_level_encoding ; out = x' + LN(MLP(x'))
    x = jnp.dot(ps_ref[...], pw_ref[...], preferred_element_type=jnp.float32) + pb_ref[...]
    h = _gelu(jnp.dot(x.astype(jnp.bfloat16), w1_ref[...],
                      preferred_element_type=jnp.float32) + b1_ref[...])
    y = jnp.dot(h.astype(jnp.bfloat16), w2_ref[...],
                preferred_element_type=jnp.float32) + b2_ref[...]
    o_ref[...] = (x + _layernorm(y, g_ref[...], be_ref[...], LN_EPS)).astype(o_ref.dtype)


def surf_embed_pallas(ps, p, row_cap=2048):
    """Fused surface patch-embed + level encoding + MLP/LayerNorm.  ps: (N, Kin) bf16."""
    N, Kin = ps.shape
    D = p["surf_patch_w"].shape[1]
    dh = p["surf_mlp_w1"].shape[1]
    # Explicit row cap as a VMEM budget (single grid step at toy sizes; no 2-way split).
    rb = min(N, row_cap)
    if rb < N:
        rb = max(8, (rb // 8) * 8)
        if N % rb:
            rb = N                       # keep blocks uniform; fall back to one step
    pb = (p["surf_patch_b"] + p["surf_level_encoding"]).reshape(1, D).astype(jnp.float32)
    return pl.pallas_call(
        _surf_kernel,
        out_shape=jax.ShapeDtypeStruct((N, D), jnp.float32),
        grid=(N // rb,),
        in_specs=[
            pl.BlockSpec((rb, Kin), lambda i: (i, 0)),
            _full_spec((Kin, D)),
            _full_spec((1, D)),
            _full_spec((D, dh)),
            _full_spec((1, dh)),
            _full_spec((dh, D)),
            _full_spec((1, D)),
            _full_spec((1, D)),
            _full_spec((1, D)),
        ],
        out_specs=pl.BlockSpec((rb, D), lambda i: (i, 0)),
        compiler_params=pltpu.CompilerParams(dimension_semantics=("arbitrary",)),
    )(ps, p["surf_patch_w"], pb,
      p["surf_mlp_w1"], p["surf_mlp_b1"].reshape(1, dh),
      p["surf_mlp_w2"], p["surf_mlp_b2"].reshape(1, D),
      p["surf_norm_g"].reshape(1, D), p["surf_norm_b"].reshape(1, D))


def _make_perceiver_kernel(n_lat, n_ctx):
    """Fused atmos patch-embed + level embedding + batched PerceiverResampler.

    One grid step processes block_nb (b, l) groups.  Latents are flattened to
    (block_nb*n_lat, D) and context rows to (block_nb*n_ctx, D); cross-attention is
    computed densely with an in-kernel block-diagonal additive bias, so every matmul
    is a single large 2-D MXU op and no in-kernel reshape is needed.
    """
    inv_nl = 1.0 / float(n_lat)
    inv_c = 1.0 / float(n_ctx)
    scale = 1.0 / math.sqrt(HEAD_DIM)

    def kernel(pa_ref, pw_ref, pb_ref, lat_ref, wq_ref, wkv_ref, wo_ref,
               g1_ref, be1_ref, w1_ref, b1_ref, w2_ref, b2_ref, g2_ref, be2_ref, o_ref):
        # context = patch_embed(im2col rows) + (patch bias + atmos level embedding)
        ctx = (jnp.dot(pa_ref[...], pw_ref[...], preferred_element_type=jnp.float32)
               + pb_ref[...]).astype(jnp.bfloat16)                       # (Ck, D)
        lat = lat_ref[...].astype(jnp.float32)                           # (R, D)
        R, Ck = lat.shape[0], ctx.shape[0]

        # Block-diagonal mask generated in-kernel (no HBM stream).  Group index via
        # float multiply + floor (exact for indices << 2^24 / group size) to avoid
        # relying on vector integer division.
        ri = lax.broadcasted_iota(jnp.int32, (R, Ck), 0).astype(jnp.float32)
        ci = lax.broadcasted_iota(jnp.int32, (R, Ck), 1).astype(jnp.float32)
        same = jnp.floor(ri * inv_nl) == jnp.floor(ci * inv_c)
        bias = jnp.where(same, 0.0, NEG_INF).astype(jnp.float32)

        depth = wq_ref.shape[0]
        for layer in range(depth):
            q16 = jnp.dot(lat.astype(jnp.bfloat16), wq_ref[layer],
                          preferred_element_type=jnp.float32).astype(jnp.bfloat16)
            kv = jnp.dot(ctx, wkv_ref[layer], preferred_element_type=jnp.float32)
            k16 = kv[:, :INNER].astype(jnp.bfloat16)
            v16 = kv[:, INNER:].astype(jnp.bfloat16)
            heads = []
            for h in range(NUM_HEADS):
                lo, hi = h * HEAD_DIM, (h + 1) * HEAD_DIM
                s = lax.dot_general(q16[:, lo:hi], k16[:, lo:hi],
                                    (((1,), (1,)), ((), ())),
                                    preferred_element_type=jnp.float32) * scale + bias
                s = s - jnp.max(s, axis=-1, keepdims=True)
                pr = jnp.exp(s)
                pr = pr * pl.reciprocal(jnp.sum(pr, axis=-1, keepdims=True), approx=True)
                heads.append(jnp.dot(pr.astype(jnp.bfloat16), v16[:, lo:hi],
                                     preferred_element_type=jnp.float32))
            attn = jnp.concatenate(heads, axis=-1)                       # (R, INNER)
            attn = jnp.dot(attn.astype(jnp.bfloat16), wo_ref[layer],
                           preferred_element_type=jnp.float32)           # (R, D)
            # Aurora PerceiverResampler: latents = latents + LN(attn); latents += LN(MLP)
            lat = _layernorm(attn, g1_ref[layer], be1_ref[layer], LN_EPS) + lat
            hdn = _gelu(jnp.dot(lat.astype(jnp.bfloat16), w1_ref[layer],
                                preferred_element_type=jnp.float32) + b1_ref[layer])
            m = jnp.dot(hdn.astype(jnp.bfloat16), w2_ref[layer],
                        preferred_element_type=jnp.float32) + b2_ref[layer]
            lat = _layernorm(m, g2_ref[layer], be2_ref[layer], LN_EPS) + lat
        o_ref[...] = lat.astype(o_ref.dtype)

    return kernel


def perceiver_levels_pallas(pa, latents0, lvl_bias, p, max_ctx_rows=2048):
    """Fused atmos patch-embed + level embedding + Perceiver level aggregation.

    pa:       (NB*C, Kin) bf16 im2col rows ordered (b, l, c)
    latents0: (n_lat, D) learned latents
    lvl_bias: (C, D) = atmos_patch_b + atmos_levels_embed(levels)
    returns:  (NB, n_lat, D) f32
    """
    C, D = lvl_bias.shape
    n_lat = latents0.shape[0]
    NBC, Kin = pa.shape
    NB = NBC // C

    # Largest block that divides NB under an explicit ctx-row cap (VMEM budget);
    # single grid step at toy sizes so constant weight blocks are DMA'd exactly once.
    block_nb = min(NB, max(1, max_ctx_rows // C))
    while NB % block_nb:
        block_nb -= 1
    if (block_nb * C) % 8 or (block_nb * n_lat) % 8:
        block_nb = NB
    nsteps = NB // block_nb
    R, Ck = block_nb * n_lat, block_nb * C

    lat0 = jnp.tile(latents0.astype(jnp.float32), (block_nb, 1))   # (R, D), same every step
    pbias = jnp.tile(lvl_bias.astype(jnp.float32), (block_nb, 1))  # (Ck, D), same every step

    weight_names = ["agg_wq", "agg_wkv", "agg_wo",
                    "agg_ln1_g", "agg_ln1_b", "agg_mlp_w1", "agg_mlp_b1",
                    "agg_mlp_w2", "agg_mlp_b2", "agg_ln2_g", "agg_ln2_b"]
    weights = [p[n] for n in weight_names]
    in_specs = ([pl.BlockSpec((Ck, Kin), lambda i: (i, 0)),
                 _full_spec((Kin, D)),
                 _full_spec((Ck, D)),
                 _full_spec((R, D))]
                + [_full_spec(w.shape) for w in weights])

    out = pl.pallas_call(
        _make_perceiver_kernel(n_lat, C),
        out_shape=jax.ShapeDtypeStruct((NB * n_lat, D), jnp.float32),
        grid=(nsteps,),
        in_specs=in_specs,
        out_specs=pl.BlockSpec((R, D), lambda i: (i, 0)),
        compiler_params=pltpu.CompilerParams(dimension_semantics=("arbitrary",)),
    )(pa, p["atmos_patch_w"], pbias, lat0, *weights)
    return out.reshape(NB, n_lat, D)


# ------------------------------- plain-JAX glue -----------------------------------------
def fourier_expansion(x, d, lower, upper):
    """Aurora FourierExpansion: sin/cos over d//2 geometrically spaced wavelengths."""
    wavelengths = np.logspace(np.log10(lower), np.log10(upper), d // 2).astype(np.float32)
    prod = x.astype(jnp.float32)[..., None] * (2.0 * np.pi / wavelengths)
    return jnp.concatenate([jnp.sin(prod), jnp.cos(prod)], axis=-1)


def pos_scale_enc(embed_dim, lat, lon, patch_size):
    # TODO(synk): approximation of aurora.model.posencoding.pos_scale_enc — per-patch
    # mean lat/lon Fourier-encoded to embed_dim//2 each; sqrt of spherical patch area
    # Fourier-encoded to embed_dim.
    H, W = lat.shape[0], lon.shape[0]
    glat, glon = jnp.meshgrid(lat, lon, indexing="ij")
    Hp, Wp, P_ = H // patch_size, W // patch_size, patch_size

    def patches(g):
        return g.reshape(Hp, P_, Wp, P_).transpose(0, 2, 1, 3).reshape(Hp * Wp, P_ * P_)

    plat, plon = patches(glat), patches(glon)
    lat_c, lon_c = plat.mean(axis=-1), plon.mean(axis=-1)
    rad = jnp.pi / 180.0
    R = 6371.0
    area = (R * R * jnp.abs(jnp.sin(plat.max(-1) * rad) - jnp.sin(plat.min(-1) * rad))
            * jnp.abs(plon.max(-1) - plon.min(-1)) * rad)
    root_area = jnp.sqrt(area)
    pos_encode = jnp.concatenate(
        [fourier_expansion(lat_c, embed_dim // 2, 1e-2, 720.0),
         fourier_expansion(lon_c, embed_dim // 2, 1e-2, 720.0)], axis=-1)
    scale_encode = fourier_expansion(root_area, embed_dim, 1e-2, 1e8)
    return pos_encode, scale_encode


def extract_patches_surf(x, patch_size):
    # x: (N, V, T, H, W) -> (N*L, V*T*P*P) bf16; column order (v, t, p, q) matches
    # F.conv3d(x, weight(D, V, T, P, P), stride=(T, P, P)) used by LevelPatchEmbed.
    # The bf16 cast is folded into the transpose's write (single HBM pass, half bytes).
    N, V, T, H, W = x.shape
    P_ = patch_size
    x = x.reshape(N, V, T, H // P_, P_, W // P_, P_)
    x = x.transpose(0, 3, 5, 1, 2, 4, 6)
    return x.reshape(N * (H // P_) * (W // P_), V * T * P_ * P_).astype(jnp.bfloat16)


def extract_patches_atmos(x, patch_size):
    # x: (B, T, V, C, H, W) -> (B*L*C, V*T*P*P) bf16 with rows ordered (b, l, c).
    # The (b c l)->(b l c) relayout the Perceiver needs is folded into this single
    # im2col transpose (and the bf16 cast into its write), so the atmos token tensor
    # never round-trips HBM between the patch embed and the Perceiver.
    B, T, V, C, H, W = x.shape
    P_ = patch_size
    x = x.reshape(B, T, V, C, H // P_, P_, W // P_, P_)
    x = x.transpose(0, 4, 6, 3, 2, 1, 5, 7)        # (B, Hp, Wp, C, V, T, P, P)
    return x.reshape(B * (H // P_) * (W // P_) * C, V * T * P_ * P_).astype(jnp.bfloat16)


# ------------------------------ deterministic parameters --------------------------------
def init_params(key):
    n_surf = len(SURF_VARS) + len(STATIC_VARS)
    n_atmos = len(ATMOS_VARS)
    kin_surf = n_surf * T_HIST * PATCH * PATCH
    kin_atmos = n_atmos * T_HIST * PATCH * PATCH
    keys = iter(jax.random.split(key, 40))

    def tn(shape, std=0.02, dtype=jnp.float32):
        return (std * jax.random.truncated_normal(next(keys), -2.0, 2.0, shape)).astype(dtype)

    bf = jnp.bfloat16
    z = lambda *s: jnp.zeros(s, jnp.float32)
    o = lambda *s: jnp.ones(s, jnp.float32)
    D = EMBED_DIM
    # K and V projections of the Perceiver fused into a single (D, 2*INNER) matrix.
    wk = tn((DEPTH, D, INNER))
    wv = tn((DEPTH, D, INNER))
    return {
        "atmos_latents": tn((N_LAT, D)),
        "surf_level_encoding": tn((D,)),
        # MXU operands are stored in bf16 (accumulation stays f32 in-kernel).
        "surf_mlp_w1": tn((D, DH), dtype=bf), "surf_mlp_b1": z(DH),
        "surf_mlp_w2": tn((DH, D), dtype=bf), "surf_mlp_b2": z(D),
        "surf_norm_g": o(D), "surf_norm_b": z(D),
        # tiny embedding linears stay plain-JAX / f32 (XLA fuses them into the adds)
        "pos_embed_w": tn((D, D)), "pos_embed_b": z(D),
        "scale_embed_w": tn((D, D)), "scale_embed_b": z(D),
        "lead_time_embed_w": tn((D, D)), "lead_time_embed_b": z(D),
        "absolute_time_embed_w": tn((D, D)), "absolute_time_embed_b": z(D),
        "atmos_levels_embed_w": tn((D, D)), "atmos_levels_embed_b": z(D),
        "surf_patch_w": tn((kin_surf, D), dtype=bf), "surf_patch_b": z(D),
        "atmos_patch_w": tn((kin_atmos, D), dtype=bf), "atmos_patch_b": z(D),
        # PerceiverResampler (level_agg), weights stacked over depth, no q/kv/out bias
        "agg_wq": tn((DEPTH, D, INNER), dtype=bf),
        "agg_wkv": jnp.concatenate([wk, wv], axis=-1).astype(bf),
        "agg_wo": tn((DEPTH, INNER, D), dtype=bf),
        "agg_ln1_g": o(DEPTH, 1, D), "agg_ln1_b": z(DEPTH, 1, D),
        "agg_mlp_w1": tn((DEPTH, D, DH), dtype=bf), "agg_mlp_b1": z(DEPTH, 1, DH),
        "agg_mlp_w2": tn((DEPTH, DH, D), dtype=bf), "agg_mlp_b2": z(DEPTH, 1, D),
        "agg_ln2_g": o(DEPTH, 1, D), "agg_ln2_b": z(DEPTH, 1, D),
    }


# ---------------------------------- forward pass -----------------------------------------
def encoder_forward(params, surf_list, static_list, atmos_list, lat, lon,
                    atmos_levels, lead_hours, abs_times_h):
    D, P_ = EMBED_DIM, PATCH
    x_surf = jnp.stack(surf_list, axis=2)            # (B, T, Vs, H, W)
    x_static = jnp.stack(static_list, axis=2)        # (1, 1, Vst, H, W)
    x_atmos = jnp.stack(atmos_list, axis=2)          # (B, T, Va, C, H, W)
    B, T, _, C, H, W = x_atmos.shape
    x_static = jnp.broadcast_to(x_static, (B, T) + x_static.shape[2:])
    x_surf = jnp.concatenate([x_surf, x_static], axis=2)
    L = (H // P_) * (W // P_)

    # --- surface path: im2col (bf16) -> fused patch-embed + level enc + MLP + LN kernel
    xs = jnp.transpose(x_surf, (0, 2, 1, 3, 4))       # b t v h w -> b v t h w
    ps = extract_patches_surf(xs, P_)                 # (B*L, Kin_s) bf16
    x_surf_tok = surf_embed_pallas(ps, params).reshape(B, L, D)

    # --- atmospheric path: im2col rows pre-ordered (b, l, c) in bf16; patch embed,
    #     "+ atmos_levels_embed" and the Perceiver level aggregation fused in one kernel
    pa = extract_patches_atmos(x_atmos, P_)           # (B*L*C, Kin_a) bf16
    lvl_enc = fourier_expansion(atmos_levels, D, 1e-2, 1e5)          # levels_expansion
    lvl_emb = lvl_enc @ params["atmos_levels_embed_w"] + params["atmos_levels_embed_b"]
    lvl_bias = lvl_emb + params["atmos_patch_b"][None, :]            # (C, D)
    agg = perceiver_levels_pallas(pa, params["atmos_latents"], lvl_bias, params)
    x_atmos_agg = agg.reshape(B, L, N_LAT, D).transpose(0, 2, 1, 3)  # (B, N_LAT, L, D)

    x = jnp.concatenate([x_surf_tok[:, None], x_atmos_agg], axis=1)  # (B, latent_levels, L, D)

    # position / scale / lead-time / absolute-time embeddings: 2-16 row matmuls, left
    # to XLA and folded into fused elementwise adds (no standalone pallas_call launches).
    pos_enc, scale_enc = pos_scale_enc(D, lat, lon, P_)
    pos_emb = pos_enc @ params["pos_embed_w"] + params["pos_embed_b"]
    scale_emb = scale_enc @ params["scale_embed_w"] + params["scale_embed_b"]
    x = x + (pos_emb + scale_emb)[None, None]
    x = x.reshape(B, -1, D)

    lt_enc = fourier_expansion(lead_hours * jnp.ones((B,), jnp.float32), D,
                               1.0 / 60.0, 24.0 * 7.0 * 3.0)
    lt_emb = lt_enc @ params["lead_time_embed_w"] + params["lead_time_embed_b"]
    at_enc = fourier_expansion(abs_times_h, D, 1.0, 24.0 * 365.25)
    at_emb = at_enc @ params["absolute_time_embed_w"] + params["absolute_time_embed_b"]
    x = x + (lt_emb + at_emb)[:, None, :]

    # pos_drop / MLP dropout: evaluation mode -> identity.
    return x


# --------------------------------------- main --------------------------------------------
if __name__ == "__main__":
    B, T, H, W = 2, T_HIST, 16, 16
    C = len(ATMOS_LEVELS)
    key = jax.random.PRNGKey(0)
    pkey, dkey = jax.random.split(key)
    params = init_params(pkey)

    dkeys = iter(jax.random.split(dkey, 16))
    surf = [jax.random.normal(next(dkeys), (B, T, H, W), jnp.float32) for _ in SURF_VARS]
    static = [jax.random.normal(next(dkeys), (1, 1, H, W), jnp.float32) for _ in STATIC_VARS]
    atmos = [jax.random.normal(next(dkeys), (B, T, C, H, W), jnp.float32) for _ in ATMOS_VARS]
    lat = jnp.linspace(60.0, 30.0, H).astype(jnp.float32)
    lon = jnp.linspace(10.0, 40.0, W).astype(jnp.float32)
    lead_hours = 6.0                                        # lead_time = timedelta(hours=6)
    abs_times_h = jnp.array([438000.0, 438006.0], jnp.float32)  # timestamps / 3600

    out = encoder_forward(params, surf, static, atmos, lat, lon,
                          jnp.asarray(ATMOS_LEVELS, jnp.float32), lead_hours, abs_times_h)
    out = jax.block_until_ready(out)

    L = (H // PATCH) * (W // PATCH)
    assert out.shape == (B, LATENT_LEVELS * L, EMBED_DIM), out.shape
    assert bool(jnp.all(jnp.isfinite(out)))
    print("KERNEL_OK")
</pallas_src>

<mosaic_0001>
module attributes {stable_mosaic.version = 11 : i64} {
  func.func @_surf_kernel(%arg0: i32, %arg1: memref<32x160xbf16, #tpu.memory_space<vmem>>, %arg2: memref<160x32xbf16, #tpu.memory_space<vmem>>, %arg3: memref<1x32xf32, #tpu.memory_space<vmem>>, %arg4: memref<32x128xbf16, #tpu.memory_space<vmem>>, %arg5: memref<1x128xf32, #tpu.memory_space<vmem>>, %arg6: memref<128x32xbf16, #tpu.memory_space<vmem>>, %arg7: memref<1x32xf32, #tpu.memory_space<vmem>>, %arg8: memref<1x32xf32, #tpu.memory_space<vmem>>, %arg9: memref<1x32xf32, #tpu.memory_space<vmem>>, %arg10: memref<32x32xf32, #tpu.memory_space<vmem>>) attributes {dimension_semantics = [#tpu.dimension_semantics<arbitrary>], iteration_bounds = array<i64: 1>, scalar_prefetch = 0 : i64, scratch_operands = 0 : i64, tpu.core_type = #tpu.core_type<tc>, window_params = [{transform_indices = @transform_0, window_bounds = array<i64: 32, 160>}, {pipeline_mode = #tpu.pipeline_mode<synchronous>, transform_indices = @transform_1, window_bounds = array<i64: 160, 32>}, {pipeline_mode = #tpu.pipeline_mode<synchronous>, transform_indices = @transform_2, window_bounds = array<i64: 1, 32>}, {pipeline_mode = #tpu.pipeline_mode<synchronous>, transform_indices = @transform_3, window_bounds = array<i64: 32, 128>}, {pipeline_mode = #tpu.pipeline_mode<synchronous>, transform_indices = @transform_4, window_bounds = array<i64: 1, 128>}, {pipeline_mode = #tpu.pipeline_mode<synchronous>, transform_indices = @transform_5, window_bounds = array<i64: 128, 32>}, {pipeline_mode = #tpu.pipeline_mode<synchronous>, transform_indices = @transform_6, window_bounds = array<i64: 1, 32>}, {pipeline_mode = #tpu.pipeline_mode<synchronous>, transform_indices = @transform_7, window_bounds = array<i64: 1, 32>}, {pipeline_mode = #tpu.pipeline_mode<synchronous>, transform_indices = @transform_8, window_bounds = array<i64: 1, 32>}, {transform_indices = @transform_9, window_bounds = array<i64: 32, 32>}]} {
    %c0 = arith.constant 0 : index
    %c0_0 = arith.constant 0 : index
    %0 = vector.load %arg1[%c0, %c0_0] : memref<32x160xbf16, #tpu.memory_space<vmem>>, vector<32x160xbf16>
    %c0_1 = arith.constant 0 : index
    %c0_2 = arith.constant 0 : index
    %1 = vector.load %arg2[%c0_1, %c0_2] : memref<160x32xbf16, #tpu.memory_space<vmem>>, vector<160x32xbf16>
    %cst = arith.constant dense<0.000000e+00> : vector<32x32xf32>
    %2 = tpu.matmul %0, %1, %cst {dimension_numbers = #tpu.dot_dimension_numbers<[1], [0], [0], [1], [0, 0, 1, 1], [], []>} : vector<32x160xbf16>, vector<160x32xbf16>, vector<32x32xf32> -> vector<32x32xf32>
    %c0_3 = arith.constant 0 : index
    %c0_4 = arith.constant 0 : index
    %3 = vector.load %arg3[%c0_3, %c0_4] : memref<1x32xf32, #tpu.memory_space<vmem>>, vector<1x32xf32>
    %4 = vector.broadcast %3 : vector<1x32xf32> to vector<32x32xf32>
    %5 = arith.addf %2, %4 : vector<32x32xf32>
    %6 = arith.truncf %5 : vector<32x32xf32> to vector<32x32xbf16>
    %c0_5 = arith.constant 0 : index
    %c0_6 = arith.constant 0 : index
    %7 = vector.load %arg4[%c0_5, %c0_6] : memref<32x128xbf16, #tpu.memory_space<vmem>>, vector<32x128xbf16>
    %cst_7 = arith.constant dense<0.000000e+00> : vector<32x128xf32>
    %8 = tpu.matmul %6, %7, %cst_7 {dimension_numbers = #tpu.dot_dimension_numbers<[1], [0], [0], [1], [0, 0, 1, 1], [], []>} : vector<32x32xbf16>, vector<32x128xbf16>, vector<32x128xf32> -> vector<32x128xf32>
    %c0_8 = arith.constant 0 : index
    %c0_9 = arith.constant 0 : index
    %9 = vector.load %arg5[%c0_8, %c0_9] : memref<1x128xf32, #tpu.memory_space<vmem>>, vector<1x128xf32>
    %10 = vector.broadcast %9 : vector<1x128xf32> to vector<32x128xf32>
    %11 = arith.addf %8, %10 : vector<32x128xf32>
    %cst_10 = arith.constant 5.000000e-01 : f32
    %12 = vector.broadcast %cst_10 : f32 to vector<32x128xf32>
    %13 = arith.mulf %12, %11 : vector<32x128xf32>
    %cst_11 = arith.constant 4.471500e-02 : f32
    %14 = vector.broadcast %cst_11 : f32 to vector<32x128xf32>
    %15 = arith.mulf %14, %11 : vector<32x128xf32>
    %16 = arith.mulf %15, %11 : vector<32x128xf32>
    %17 = arith.mulf %16, %11 : vector<32x128xf32>
    %18 = arith.addf %11, %17 : vector<32x128xf32>
    %cst_12 = arith.constant 0.797884583 : f32
    %19 = vector.broadcast %cst_12 : f32 to vector<32x128xf32>
    %20 = arith.mulf %19, %18 : vector<32x128xf32>
    %21 = math.tanh %20 : vector<32x128xf32>
    %cst_13 = arith.constant 1.000000e+00 : f32
    %22 = vector.broadcast %cst_13 : f32 to vector<32x128xf32>
    %23 = arith.addf %22, %21 : vector<32x128xf32>
    %24 = arith.mulf %13, %23 : vector<32x128xf32>
    %25 = arith.truncf %24 : vector<32x128xf32> to vector<32x128xbf16>
    %c0_14 = arith.constant 0 : index
    %c0_15 = arith.constant 0 : index
    %26 = vector.load %arg6[%c0_14, %c0_15] : memref<128x32xbf16, #tpu.memory_space<vmem>>, vector<128x32xbf16>
    %cst_16 = arith.constant dense<0.000000e+00> : vector<32x32xf32>
    %27 = tpu.matmul %25, %26, %cst_16 {dimension_numbers = #tpu.dot_dimension_numbers<[1], [0], [0], [1], [0, 0, 1, 1], [], []>} : vector<32x128xbf16>, vector<128x32xbf16>, vector<32x32xf32> -> vector<32x32xf32>
    %c0_17 = arith.constant 0 : index
    %c0_18 = arith.constant 0 : index
    %28 = vector.load %arg7[%c0_17, %c0_18] : memref<1x32xf32, #tpu.memory_space<vmem>>, vector<1x32xf32>
    %29 = vector.broadcast %28 : vector<1x32xf32> to vector<32x32xf32>
    %30 = arith.addf %27, %29 : vector<32x32xf32>
    %c0_19 = arith.constant 0 : index
    %c0_20 = arith.constant 0 : index
    %31 = vector.load %arg8[%c0_19, %c0_20] : memref<1x32xf32, #tpu.memory_space<vmem>>, vector<1x32xf32>
    %c0_21 = arith.constant 0 : index
    %c0_22 = arith.constant 0 : index
    %32 = vector.load %arg9[%c0_21, %c0_22] : memref<1x32xf32, #tpu.memory_space<vmem>>, vector<1x32xf32>
    %cst_23 = arith.constant dense<0.000000e+00> : vector<32xf32>
    %33 = vector.multi_reduction <add>, %30, %cst_23 [1] : vector<32x32xf32> to vector<32xf32>
    %34 = vector.shape_cast %33 : vector<32xf32> to vector<32x1xf32>
    %cst_24 = arith.constant 3.200000e+01 : f32
    %35 = vector.broadcast %cst_24 : f32 to vector<32x1xf32>
    %36 = arith.divf %34, %35 : vector<32x1xf32>
    %37 = vector.broadcast %36 : vector<32x1xf32> to vector<32x32xf32>
    %38 = arith.subf %30, %37 : vector<32x32xf32>
    %39 = arith.mulf %38, %38 : vector<32x32xf32>
    %cst_25 = arith.constant dense<0.000000e+00> : vector<32xf32>
    %40 = vector.multi_reduction <add>, %39, %cst_25 [1] : vector<32x32xf32> to vector<32xf32>
    %41 = vector.shape_cast %40 : vector<32xf32> to vector<32x1xf32>
    %cst_26 = arith.constant 3.200000e+01 : f32
    %42 = vector.broadcast %cst_26 : f32 to vector<32x1xf32>
    %43 = arith.divf %41, %42 : vector<32x1xf32>
    %44 = vector.broadcast %36 : vector<32x1xf32> to vector<32x32xf32>
    %45 = arith.subf %30, %44 : vector<32x32xf32>
    %cst_27 = arith.constant 9.99999974E-6 : f32
    %46 = vector.broadcast %cst_27 : f32 to vector<32x1xf32>
    %47 = arith.addf %43, %46 : vector<32x1xf32>
    %48 = math.rsqrt %47 : vector<32x1xf32>
    %49 = vector.broadcast %48 : vector<32x1xf32> to vector<32x32xf32>
    %50 = arith.mulf %45, %49 : vector<32x32xf32>
    %51 = vector.broadcast %31 : vector<1x32xf32> to vector<32x32xf32>
    %52 = arith.mulf %50, %51 : vector<32x32xf32>
    %53 = vector.broadcast %32 : vector<1x32xf32> to vector<32x32xf32>
    %54 = arith.addf %52, %53 : vector<32x32xf32>
    %55 = arith.addf %5, %54 : vector<32x32xf32>
    %c0_28 = arith.constant 0 : index
    %c0_29 = arith.constant 0 : index
    %56 = vector.load %arg10[%c0_28, %c0_29] : memref<32x32xf32, #tpu.memory_space<vmem>>, vector<32x32xf32>
    tpu.vector_store %arg10[%c0_28, %c0_29], %55 {strides = array<i32>} : memref<32x32xf32, #tpu.memory_space<vmem>>, vector<32x32xf32>,
    return
  }
  func.func @transform_0(%arg0: i32) -> (i32, i32) {
    %c0_i32 = arith.constant 0 : i32
    %c0_i32_0 = arith.constant 0 : i32
    return %arg0, %c0_i32 : i32, i32
  }
  func.func @transform_1(%arg0: i32) -> (i32, i32) {
    %c0_i32 = arith.constant 0 : i32
    %c0_i32_0 = arith.constant 0 : i32
    %c0_i32_1 = arith.constant 0 : i32
    return %c0_i32, %c0_i32_0 : i32, i32
  }
  func.func @transform_2(%arg0: i32) -> (i32, i32) {
    %c0_i32 = arith.constant 0 : i32
    %c0_i32_0 = arith.constant 0 : i32
    %c0_i32_1 = arith.constant 0 : i32
    return %c0_i32, %c0_i32_0 : i32, i32
  }
  func.func @transform_3(%arg0: i32) -> (i32, i32) {
    %c0_i32 = arith.constant 0 : i32
    %c0_i32_0 = arith.constant 0 : i32
    %c0_i32_1 = arith.constant 0 : i32
    return %c0_i32, %c0_i32_0 : i32, i32
  }
  func.func @transform_4(%arg0: i32) -> (i32, i32) {
    %c0_i32 = arith.constant 0 : i32
    %c0_i32_0 = arith.constant 0 : i32
    %c0_i32_1 = arith.constant 0 : i32
    return %c0_i32, %c0_i32_0 : i32, i32
  }
  func.func @transform_5(%arg0: i32) -> (i32, i32) {
    %c0_i32 = arith.constant 0 : i32
    %c0_i32_0 = arith.constant 0 : i32
    %c0_i32_1 = arith.constant 0 : i32
    return %c0_i32, %c0_i32_0 : i32, i32
  }
  func.func @transform_6(%arg0: i32) -> (i32, i32) {
    %c0_i32 = arith.constant 0 : i32
    %c0_i32_0 = arith.constant 0 : i32
    %c0_i32_1 = arith.constant 0 : i32
    return %c0_i32, %c0_i32_0 : i32, i32
  }
  func.func @transform_7(%arg0: i32) -> (i32, i32) {
    %c0_i32 = arith.constant 0 : i32
    %c0_i32_0 = arith.constant 0 : i32
    %c0_i32_1 = arith.constant 0 : i32
    return %c0_i32, %c0_i32_0 : i32, i32
  }
  func.func @transform_8(%arg0: i32) -> (i32, i32) {
    %c0_i32 = arith.constant 0 : i32
    %c0_i32_0 = arith.constant 0 : i32
    %c0_i32_1 = arith.constant 0 : i32
    return %c0_i32, %c0_i32_0 : i32, i32
  }
  func.func @transform_9(%arg0: i32) -> (i32, i32) {
    %c0_i32 = arith.constant 0 : i32
    %c0_i32_0 = arith.constant 0 : i32
    return %arg0, %c0_i32 : i32, i32
  }
}

</mosaic_0001>

<llo_original>
// kernel: tpu_custom_call.1
$region0: #{tpu_custom_call.1}
  #allocation0 [shape = 'u32[]', space=smem, size = 0x4, offset = 0x4, fixed_abs, tag = 'smem constant byte address 0x4 - core index']
  #allocation1 [shape = 'u32[144,128]{1,0:T(1,128)}', space=vmem, size = 0x12000, scoped, tag = 'internal scratch']
  %s0 = inlined_call_operand.vmem [shape: bf16[32,160], index: 0, kind: input, shape index: {}]
  %s1 = inlined_call_operand.vmem [shape: bf16[160,32], index: 1, kind: input, shape index: {}]
  %s2 = inlined_call_operand.vmem [shape: f32[1,32], index: 2, kind: input, shape index: {}]
  %s3 = inlined_call_operand.vmem [shape: bf16[32,128], index: 3, kind: input, shape index: {}]
  %s4 = inlined_call_operand.vmem [shape: f32[1,128], index: 4, kind: input, shape index: {}]
  %s5 = inlined_call_operand.vmem [shape: bf16[128,32], index: 5, kind: input, shape index: {}]
  %s6 = inlined_call_operand.vmem [shape: f32[1,32], index: 6, kind: input, shape index: {}]
  %s7 = inlined_call_operand.vmem [shape: f32[1,32], index: 7, kind: input, shape index: {}]
  %s8 = inlined_call_operand.vmem [shape: f32[1,32], index: 8, kind: input, shape index: {}]
  %s9 = inlined_call_operand.hbm [shape: f32[32,32], index: 9, kind: output, shape index: {}]
  %s10 = sld [smem:[#allocation0]]
  $region46: #{tpu_custom_call.1} parent=0
    _
  %s12 = ssub.s32 1, %s10
  %s13 = scalar_select 0, %s12, %s10
  $region1: #{tpu_custom_call.1} parent=0
    #allocation2 [shape = 'u8[16384]{0}', space=vmem, size = 0x4000, scoped, tag = 'output window, operand 0, single buffered']
    #allocation3 [shape = 's32[1]{0}', space=sflag, size = 0x4, scoped, tag = 'scoped memory for tpu_custom_call.1']
    %14 = vsyncpa [#allocation3], 0
    // Predicated region
    $region2: #{tpu_custom_call.1} parent=1 // pred_check
      _
    $region3: #{tpu_custom_call.1} parent=1 // pred_check_branch
      %16 = sbr.rel (0) target = $region5
    $region4: #{tpu_custom_call.1} parent=1 // pred_region
      _
    $region5: #{tpu_custom_call.1} parent=1 // pred_fallthru
      _
    // Predicated region
    $region6: #{tpu_custom_call.1} parent=1 // pred_check
      _
    $region7: #{tpu_custom_call.1} parent=1 // pred_check_branch
      %18 = sbr.rel (0) target = $region9
    $region8: #{tpu_custom_call.1} parent=1 // pred_region
      _
    $region9: #{tpu_custom_call.1} parent=1 // pred_fallthru
      _
    // Predicated region
    $region10: #{tpu_custom_call.1} parent=1 // pred_check
      _
    $region11: #{tpu_custom_call.1} parent=1 // pred_check_branch
      %20 = sbr.rel (0) target = $region13
    $region12: #{tpu_custom_call.1} parent=1 // pred_region
      _
    $region13: #{tpu_custom_call.1} parent=1 // pred_fallthru
      _
    // Predicated region
    $region14: #{tpu_custom_call.1} parent=1 // pred_check
      _
    $region15: #{tpu_custom_call.1} parent=1 // pred_check_branch
      %22 = sbr.rel (0) target = $region17
    $region16: #{tpu_custom_call.1} parent=1 // pred_region
      _
    $region17: #{tpu_custom_call.1} parent=1 // pred_fallthru
      _
    // Predicated region
    $region18: #{tpu_custom_call.1} parent=1 // pred_check
      _
    $region19: #{tpu_custom_call.1} parent=1 // pred_check_branch
      %24 = sbr.rel (0) target = $region21
    $region20: #{tpu_custom_call.1} parent=1 // pred_region
      _
    $region21: #{tpu_custom_call.1} parent=1 // pred_fallthru
      _
    // Predicated region
    $region22: #{tpu_custom_call.1} parent=1 // pred_check
      _
    $region23: #{tpu_custom_call.1} parent=1 // pred_check_branch
      %26 = sbr.rel (0) target = $region25
    $region24: #{tpu_custom_call.1} parent=1 // pred_region
      _
    $region25: #{tpu_custom_call.1} parent=1 // pred_fallthru
      _
    // Predicated region
    $region26: #{tpu_custom_call.1} parent=1 // pred_check
      _
    $region27: #{tpu_custom_call.1} parent=1 // pred_check_branch
      %28 = sbr.rel (0) target = $region29
    $region28: #{tpu_custom_call.1} parent=1 // pred_region
      _
    $region29: #{tpu_custom_call.1} parent=1 // pred_fallthru
      _
    // Predicated region
    $region30: #{tpu_custom_call.1} parent=1 // pred_check
      _
    $region31: #{tpu_custom_call.1} parent=1 // pred_check_branch
      %30 = sbr.rel (0) target = $region33
    $region32: #{tpu_custom_call.1} parent=1 // pred_region
      _
    $region33: #{tpu_custom_call.1} parent=1 // pred_fallthru
      _
    // Predicated region
    $region34: #{tpu_custom_call.1} parent=1 // pred_check
      _
    $region35: #{tpu_custom_call.1} parent=1 // pred_check_branch
      %32 = sbr.rel (0) target = $region37
    $region36: #{tpu_custom_call.1} parent=1 // pred_region
      _
    $region37: #{tpu_custom_call.1} parent=1 // pred_fallthru
      _
    %v34 = vld [vmem:[%s0] sm:$0xff]
    %v35 = vld [vmem:[%s0 + $0x8] sm:$0xff]
    %v36 = vld [vmem:[%s0 + $0x10] sm:$0xff]
    %v37 = vld [vmem:[%s0 + $0x18] sm:$0xff]
    %v38 = vld [vmem:[%s1] sm:$0xf]
    %v39 = vld [vmem:[%s1 + $0x4] sm:$0xf]
    %v40 = vld [vmem:[%s1 + $0x8] sm:$0xf]
    %v41 = vld [vmem:[%s1 + $0xc] sm:$0xf]
    %v42 = vld [vmem:[%s1 + $0x10] sm:$0xf]
    %v43 = vld [vmem:[%s1 + $0x14] sm:$0xf]
    %v44 = vld [vmem:[%s1 + $0x18] sm:$0xf]
    %v45 = vld [vmem:[%s1 + $0x1c] sm:$0xf]
    %v46 = vld [vmem:[%s1 + $0x20] sm:$0xf]
    %v47 = vld [vmem:[%s1 + $0x24] sm:$0xf]
    %v48 = vld [vmem:[%s1 + $0x28] sm:$0xf]
    %v49 = vld [vmem:[%s1 + $0x2c] sm:$0xf]
    %v50 = vld [vmem:[%s1 + $0x30] sm:$0xf]
    %v51 = vld [vmem:[%s1 + $0x34] sm:$0xf]
    %v52 = vld [vmem:[%s1 + $0x38] sm:$0xf]
    %v53 = vld [vmem:[%s1 + $0x3c] sm:$0xf]
    %v54 = vld [vmem:[%s1 + $0x40] sm:$0xf]
    %v55 = vld [vmem:[%s1 + $0x44] sm:$0xf]
    %v56 = vld [vmem:[%s1 + $0x48] sm:$0xf]
    %v57 = vld [vmem:[%s1 + $0x4c] sm:$0xf]
    %v58 = vld [vmem:[%s2] sm:$0x1]
    %v60 = vlaneseq
    %v61 = vshrl.u32 %v60, 7
    %v62 = vsub.s32 0, %v61
    %v63 = vrot.slane %v58, %v62
    %v69 = vunpack.c.l.b16 %v34
    %v70 = vunpack.c.h.b16 %v34
    %v71 = vunpack.c.l.b16 %v35
    %v72 = vunpack.c.h.b16 %v35
    %v73 = vunpack.c.l.b16 %v36
    %v74 = vunpack.c.h.b16 %v36
    %v75 = vunpack.c.l.b16 %v37
    %v76 = vunpack.c.h.b16 %v37
    %v77 = vpack.c.b16 %v71, %v69
    %v78 = vpack.c.b16 %v72, %v70
    %v79 = vpack.c.b16 %v75, %v73
    %v80 = vpack.c.b16 %v76, %v74
    %v103 = vunpack.c.l.b16 %v38
    %v104 = vunpack.c.l.b16 %v39
    %v105 = vunpack.c.l.b16 %v40
    %v106 = vunpack.c.l.b16 %v41
    %v107 = vunpack.c.l.b16 %v42
    %v108 = vunpack.c.l.b16 %v43
    %v109 = vunpack.c.l.b16 %v44
    %v110 = vunpack.c.l.b16 %v45
    %v111 = vunpack.c.l.b16 %v46
    %v112 = vunpack.c.l.b16 %v47
    %v113 = vunpack.c.l.b16 %v48
    %v114 = vunpack.c.l.b16 %v49
    %v115 = vunpack.c.l.b16 %v50
    %v116 = vunpack.c.l.b16 %v51
    %v117 = vunpack.c.l.b16 %v52
    %v118 = vunpack.c.l.b16 %v53
    %v119 = vunpack.c.l.b16 %v54
    %v120 = vunpack.c.l.b16 %v55
    %v121 = vunpack.c.l.b16 %v56
    %v122 = vunpack.c.l.b16 %v57
    %v123 = vpack.c.b16 %v104, %v103
    %v124 = vpack.c.b16 %v106, %v105
    %v125 = vpack.c.b16 %v108, %v107
    %v126 = vpack.c.b16 %v110, %v109
    %v127 = vpack.c.b16 %v112, %v111
    %v128 = vpack.c.b16 %v114, %v113
    %v129 = vpack.c.b16 %v116, %v115
    %v130 = vpack.c.b16 %v118, %v117
    %v131 = vpack.c.b16 %v120, %v119
    %v132 = vpack.c.b16 %v122, %v121
    %vm143 = vcmask 261120
    %v145 = vsel %vm143, %v78, 0
    %v148 = vsel %vm143, %v80, 0
    %150 = vmatprep.subr.bf16.mxu0 0
    %151 = vmatpush1.bf16.msra.mxu0 %v123
    %152 = vmatprep.subr.bf16.mxu0 0
    %153 = vmatpush1.bf16.msra.mxu0 %v124
    %154 = vmatprep.subr.bf16.mxu0 0
    %155 = vmatpush1.bf16.msra.mxu0 %v125
    %156 = vmatprep.subr.bf16.mxu0 0
    %157 = vmatpush1.bf16.msra.mxu0 %v126
    %158 = vmatprep.subr.bf16.mxu0 0
    %159 = vmatpush1.bf16.msra.mxu0 %v127
    %160 = vmatprep.subr.bf16.mxu0 0
    %161 = vmatpush1.bf16.msra.mxu0 %v128
    %162 = vmatprep.subr.bf16.mxu0 0
    %163 = vmatpush1.bf16.msra.mxu0 %v129
    %164 = vmatprep.subr.bf16.mxu0 0
    %165 = vmatpush1.bf16.msra.mxu0 %v130
    %166 = vmatprep.subr.bf16.mxu0 0
    %167 = vmatpush1.bf16.msra.mxu0 %v131
    %168 = vmatprep.subr.bf16.mxu0 0
    %169 = vmatpush1.bf16.msra.mxu0 %v132
    %170 = vmatprep.subr.bf16.mxu0 0
    %171 = vmatpush1.bf16.msra.mxu0 0
    %172 = vmatprep.subr.bf16.mxu0 0
    %173 = vmatpush1.bf16.msra.mxu0 0
    %174 = vmatprep.subr.bf16.mxu0 0
    %175 = vmatpush1.bf16.msra.mxu0 0
    %176 = vmatprep.subr.bf16.mxu0 0
    %177 = vmatpush1.bf16.msra.mxu0 0
    %178 = vmatprep.subr.bf16.mxu0 0
    %179 = vmatpush1.bf16.msra.mxu0 0
    %180 = vmatprep.subr.bf16.mxu0 0
    %181 = vmatpush1.bf16.msra.mxu0 0
    %182 = vmatprep.mubr.bf16.mxu0 %v145
    %183 = vmatmul.mubr.bf16.gmra.mrb[0].mxu0 %v77
    %v184 = vpop.f32.mrb[0].mxu0
    %v185 = vadd.f32 %v63, %v184
    %v186 = vpop.f32.mrb[0].mxu0
    %v187 = vpop.f32.mrb[0].mxu0
    %v188 = vadd.f32 %v63, %v187
    %v189 = vpop.f32.mrb[0].mxu0
    %190 = vmatprep.mubr.bf16.mxu0 %v148
    %191 = vmatmul.mubr.bf16.gmra.mrb[0].mxu0 %v79
    %v192 = vpop.f32.mrb[0].mxu0
    %v193 = vadd.f32 %v63, %v192
    %v194 = vpop.f32.mrb[0].mxu0
    %v195 = vpop.f32.mrb[0].mxu0
    %v196 = vadd.f32 %v63, %v195
    %v197 = vpop.f32.mrb[0].mxu0
    %198 = vdwg.mxu0
    %v199 = vpack.c.bf16 %v188, %v185
    %v200 = vpack.c.bf16 %v196, %v193
    %v201 = vld [vmem:[%s3] sm:$0xf]
    %v202 = vld [vmem:[%s3 + $0x4] sm:$0xf]
    %v203 = vld [vmem:[%s3 + $0x8] sm:$0xf]
    %v204 = vld [vmem:[%s3 + $0xc] sm:$0xf]
    %v205 = vld [vmem:[%s4] sm:$0x1]
    %v207 = vlaneseq
    %v208 = vshrl.u32 %v207, 7
    %v209 = vsub.s32 0, %v208
    %v210 = vrot.slane %v205, %v209
    %v216 = vunpack.c.l.b16 %v201
    %v217 = vunpack.c.l.b16 %v202
    %v218 = vunpack.c.l.b16 %v203
    %v219 = vunpack.c.l.b16 %v204
    %v220 = vpack.c.b16 %v217, %v216
    %v221 = vpack.c.b16 %v219, %v218
    %v225 = vsel %vm143, %v199, 0
    %v228 = vsel %vm143, %v200, 0
    %230 = vmatprep.subr.bf16.mxu0 0
    %231 = vmatpush1.bf16.msra.mxu0 %v220
    %232 = vmatprep.subr.bf16.mxu0 0
    %233 = vmatpush1.bf16.msra.mxu0 %v221
    %234 = vmatprep.subr.bf16.mxu0 0
    %235 = vmatpush1.bf16.msra.mxu0 0
    %236 = vmatprep.subr.bf16.mxu0 0
    %237 = vmatpush1.bf16.msra.mxu0 0
    %238 = vmatprep.subr.bf16.mxu0 0
    %239 = vmatpush1.bf16.msra.mxu0 0
    %240 = vmatprep.subr.bf16.mxu0 0
    %241 = vmatpush1.bf16.msra.mxu0 0
    %242 = vmatprep.subr.bf16.mxu0 0
    %243 = vmatpush1.bf16.msra.mxu0 0
    %244 = vmatprep.subr.bf16.mxu0 0
    %245 = vmatpush1.bf16.msra.mxu0 0
    %246 = vmatprep.subr.bf16.mxu0 0
    %247 = vmatpush1.bf16.msra.mxu0 0
    %248 = vmatprep.subr.bf16.mxu0 0
    %249 = vmatpush1.bf16.msra.mxu0 0
    %250 = vmatprep.subr.bf16.mxu0 0
    %251 = vmatpush1.bf16.msra.mxu0 0
    %252 = vmatprep.subr.bf16.mxu0 0
    %253 = vmatpush1.bf16.msra.mxu0 0
    %254 = vmatprep.subr.bf16.mxu0 0
    %255 = vmatpush1.bf16.msra.mxu0 0
    %256 = vmatprep.subr.bf16.mxu0 0
    %257 = vmatpush1.bf16.msra.mxu0 0
    %258 = vmatprep.subr.bf16.mxu0 0
    %259 = vmatpush1.bf16.msra.mxu0 0
    %260 = vmatprep.subr.bf16.mxu0 0
    %261 = vmatpush1.bf16.msra.mxu0 0
    %262 = vmatprep.mubr.bf16.mxu0 0
    %263 = vmatmul.mubr.bf16.gmra.mrb[0].mxu0 %v225
    %v264 = vpop.f32.mrb[0].mxu0
    %v265 = vadd.f32 %v210, %v264
    %v266 = vpop.f32.mrb[0].mxu0
    %v267 = vpop.f32.mrb[0].mxu0
    %v268 = vadd.f32 %v210, %v267
    %v269 = vpop.f32.mrb[0].mxu0
    %270 = vmatprep.mubr.bf16.mxu0 0
    %271 = vmatmul.mubr.bf16.gmra.mrb[0].mxu0 %v228
    %v272 = vpop.f32.mrb[0].mxu0
    %v273 = vadd.f32 %v210, %v272
    %v274 = vpop.f32.mrb[0].mxu0
    %v275 = vpop.f32.mrb[0].mxu0
    %v276 = vadd.f32 %v210, %v275
    %v277 = vpop.f32.mrb[0].mxu0
    %278 = vdwg.mxu0
    %v279 = vmul.f32 %v265, 0.5
    %v280 = vmul.f32 %v268, 0.5
    %v281 = vmul.f32 %v273, 0.5
    %v282 = vmul.f32 %v276, 0.5
    %v283 = vmul.f32 %v265, 0.044715
    %v284 = vmul.f32 %v268, 0.044715
    %v285 = vmul.f32 %v273, 0.044715
    %v286 = vmul.f32 %v276, 0.044715
    %v287 = vmul.f32 %v283, %v265
    %v288 = vmul.f32 %v284, %v268
    %v289 = vmul.f32 %v285, %v273
    %v290 = vmul.f32 %v286, %v276
    %v291 = vmul.f32 %v287, %v265
    %v292 = vmul.f32 %v288, %v268
    %v293 = vmul.f32 %v289, %v273
    %v294 = vmul.f32 %v290, %v276
    %v295 = vadd.f32 %v265, %v291
    %v296 = vadd.f32 %v268, %v292
    %v297 = vadd.f32 %v273, %v293
    %v298 = vadd.f32 %v276, %v294
    %v299 = vmul.f32 %v295, 0.7978846
    %v300 = vmul.f32 %v296, 0.7978846
    %v301 = vmul.f32 %v297, 0.7978846
    %v302 = vmul.f32 %v298, 0.7978846
    %v303 = vtanh.pop %v299
    %v304 = vtanh.pop %v300
    %v305 = vtanh.pop %v301
    %v306 = vtanh.pop %v302
    %v307 = vadd.f32 %v303, 1.0
    %v308 = vadd.f32 %v304, 1.0
    %v309 = vadd.f32 %v305, 1.0
    %v310 = vadd.f32 %v306, 1.0
    %v311 = vmul.f32 %v279, %v307
    %v312 = vmul.f32 %v280, %v308
    %v313 = vmul.f32 %v281, %v309
    %v314 = vmul.f32 %v282, %v310
    %v315 = vpack.c.bf16 %v312, %v311
    %v316 = vpack.c.bf16 %v314, %v313
    %v317 = vld [vmem:[%s5] sm:$0xf]
    %v318 = vld [vmem:[%s5 + $0x4] sm:$0xf]
    %v319 = vld [vmem:[%s5 + $0x8] sm:$0xf]
    %v320 = vld [vmem:[%s5 + $0xc] sm:$0xf]
    %v321 = vld [vmem:[%s5 + $0x10] sm:$0xf]
    %v322 = vld [vmem:[%s5 + $0x14] sm:$0xf]
    %v323 = vld [vmem:[%s5 + $0x18] sm:$0xf]
    %v324 = vld [vmem:[%s5 + $0x1c] sm:$0xf]
    %v325 = vld [vmem:[%s5 + $0x20] sm:$0xf]
    %v326 = vld [vmem:[%s5 + $0x24] sm:$0xf]
    %v327 = vld [vmem:[%s5 + $0x28] sm:$0xf]
    %v328 = vld [vmem:[%s5 + $0x2c] sm:$0xf]
    %v329 = vld [vmem:[%s5 + $0x30] sm:$0xf]
    %v330 = vld [vmem:[%s5 + $0x34] sm:$0xf]
    %v331 = vld [vmem:[%s5 + $0x38] sm:$0xf]
    %v332 = vld [vmem:[%s5 + $0x3c] sm:$0xf]
    %v333 = vld [vmem:[%s6] sm:$0x1]
    %v335 = vlaneseq
    %v336 = vshrl.u32 %v335, 7
    %v337 = vsub.s32 0, %v336
    %v338 = vrot.slane %v333, %v337
    %v356 = vunpack.c.l.b16 %v317
    %v357 = vunpack.c.l.b16 %v318
    %v358 = vunpack.c.l.b16 %v319
    %v359 = vunpack.c.l.b16 %v320
    %v360 = vunpack.c.l.b16 %v321
    %v361 = vunpack.c.l.b16 %v322
    %v362 = vunpack.c.l.b16 %v323
    %v363 = vunpack.c.l.b16 %v324
    %v364 = vunpack.c.l.b16 %v325
    %v365 = vunpack.c.l.b16 %v326
    %v366 = vunpack.c.l.b16 %v327
    %v367 = vunpack.c.l.b16 %v328
    %v368 = vunpack.c.l.b16 %v329
    %v369 = vunpack.c.l.b16 %v330
    %v370 = vunpack.c.l.b16 %v331
    %v371 = vunpack.c.l.b16 %v332
    %v372 = vpack.c.b16 %v357, %v356
    %v373 = vpack.c.b16 %v359, %v358
    %v374 = vpack.c.b16 %v361, %v360
    %v375 = vpack.c.b16 %v363, %v362
    %v376 = vpack.c.b16 %v365, %v364
    %v377 = vpack.c.b16 %v367, %v366
    %v378 = vpack.c.b16 %v369, %v368
    %v379 = vpack.c.b16 %v371, %v370
    %388 = vmatprep.subr.bf16.mxu0 0
    %389 = vmatpush1.bf16.msra.mxu0 %v372
    %390 = vmatprep.subr.bf16.mxu0 0
    %391 = vmatpush1.bf16.msra.mxu0 %v373
    %392 = vmatprep.subr.bf16.mxu0 0
    %393 = vmatpush1.bf16.msra.mxu0 %v374
    %394 = vmatprep.subr.bf16.mxu0 0
    %395 = vmatpush1.bf16.msra.mxu0 %v375
    %396 = vmatprep.subr.bf16.mxu0 0
    %397 = vmatpush1.bf16.msra.mxu0 %v376
    %398 = vmatprep.subr.bf16.mxu0 0
    %399 = vmatpush1.bf16.msra.mxu0 %v377
    %400 = vmatprep.subr.bf16.mxu0 0
    %401 = vmatpush1.bf16.msra.mxu0 %v378
    %402 = vmatprep.subr.bf16.mxu0 0
    %403 = vmatpush1.bf16.msra.mxu0 %v379
    %404 = vmatprep.subr.bf16.mxu0 0
    %405 = vmatpush1.bf16.msra.mxu0 0
    %406 = vmatprep.subr.bf16.mxu0 0
    %407 = vmatpush1.bf16.msra.mxu0 0
    %408 = vmatprep.subr.bf16.mxu0 0
    %409 = vmatpush1.bf16.msra.mxu0 0
    %410 = vmatprep.subr.bf16.mxu0 0
    %411 = vmatpush1.bf16.msra.mxu0 0
    %412 = vmatprep.subr.bf16.mxu0 0
    %413 = vmatpush1.bf16.msra.mxu0 0
    %414 = vmatprep.subr.bf16.mxu0 0
    %415 = vmatpush1.bf16.msra.mxu0 0
    %416 = vmatprep.subr.bf16.mxu0 0
    %417 = vmatpush1.bf16.msra.mxu0 0
    %418 = vmatprep.subr.bf16.mxu0 0
    %419 = vmatpush1.bf16.msra.mxu0 0
    %420 = vmatprep.mubr.bf16.mxu0 0
    %421 = vmatmul.mubr.bf16.gmra.mrb[0].mxu0 %v315
    %v422 = vpop.f32.mrb[0].mxu0
    %v423 = vadd.f32 %v338, %v422
    %v424 = vpop.f32.mrb[0].mxu0
    %v425 = vpop.f32.mrb[0].mxu0
    %v426 = vadd.f32 %v338, %v425
    %v427 = vpop.f32.mrb[0].mxu0
    %428 = vmatprep.mubr.bf16.mxu0 0
    %429 = vmatmul.mubr.bf16.gmra.mrb[0].mxu0 %v316
    %v430 = vpop.f32.mrb[0].mxu0
    %v431 = vadd.f32 %v338, %v430
    %v432 = vpop.f32.mrb[0].mxu0
    %v433 = vpop.f32.mrb[0].mxu0
    %v434 = vadd.f32 %v338, %v433
    %v435 = vpop.f32.mrb[0].mxu0
    %436 = vdwg.mxu0
    %v437 = vld [vmem:[%s7] sm:$0x1]
    %v438 = vld [vmem:[%s8] sm:$0x1]
    %v439 = vsel %vm143, %v423, 0.0
    %440 = vadd.xlane.f32.xlu0 %v439
    %v441 = vpop.xlane.xlu0 %440
    %v442 = vsel %vm143, %v426, 0.0
    %443 = vadd.xlane.f32.xlu0 %v442
    %v444 = vpop.xlane.xlu0 %443
    %v445 = vsel %vm143, %v431, 0.0
    %446 = vadd.xlane.f32.xlu0 %v445
    %v447 = vpop.xlane.xlu0 %446
    %v448 = vsel %vm143, %v434, 0.0
    %449 = vadd.xlane.f32.xlu0 %v448
    %v450 = vpop.xlane.xlu0 %449
    %v451 = vrcp.pop 32.0
    %v452 = vmul.f32 %v441, %v451
    %v453 = vmul.f32 %v444, %v451
    %v454 = vmul.f32 %v447, %v451
    %v455 = vmul.f32 %v450, %v451
    %v456 = vsub.f32 %v423, %v452
    %v457 = vsub.f32 %v426, %v453
    %v458 = vsub.f32 %v431, %v454
    %v459 = vsub.f32 %v434, %v455
    %v460 = vmul.f32 %v456, %v456
    %v461 = vmul.f32 %v457, %v457
    %v462 = vmul.f32 %v458, %v458
    %v463 = vmul.f32 %v459, %v459
    %v464 = vsel %vm143, %v460, 0.0
    %465 = vadd.xlane.f32.xlu0 %v464
    %v466 = vpop.xlane.xlu0 %465
    %v467 = vsel %vm143, %v461, 0.0
    %468 = vadd.xlane.f32.xlu0 %v467
    %v469 = vpop.xlane.xlu0 %468
    %v470 = vsel %vm143, %v462, 0.0
    %471 = vadd.xlane.f32.xlu0 %v470
    %v472 = vpop.xlane.xlu0 %471
    %v473 = vsel %vm143, %v463, 0.0
    %474 = vadd.xlane.f32.xlu0 %v473
    %v475 = vpop.xlane.xlu0 %474
    %v476 = vmul.f32 %v466, %v451
    %v477 = vmul.f32 %v469, %v451
    %v478 = vmul.f32 %v472, %v451
    %v479 = vmul.f32 %v475, %v451
    %v480 = vadd.f32 %v476, 1e-05
    %v481 = vadd.f32 %v477, 1e-05
    %v482 = vadd.f32 %v478, 1e-05
    %v483 = vadd.f32 %v479, 1e-05
    %v484 = vrsqrt.pop %v480
    %v485 = vrsqrt.pop %v481
    %v486 = vrsqrt.pop %v482
    %v487 = vrsqrt.pop %v483
    %v488 = vmul.f32 %v456, %v484
    %v489 = vmul.f32 %v457, %v485
    %v490 = vmul.f32 %v458, %v486
    %v491 = vmul.f32 %v459, %v487
    %v493 = vlaneseq
    %v494 = vshrl.u32 %v493, 7
    %v495 = vsub.s32 0, %v494
    %v496 = vrot.slane %v437, %v495
    %v498 = vmul.f32 %v488, %v496
    %v499 = vmul.f32 %v489, %v496
    %v500 = vmul.f32 %v490, %v496
    %v501 = vmul.f32 %v491, %v496
    %v503 = vlaneseq
    %v504 = vshrl.u32 %v503, 7
    %v505 = vsub.s32 0, %v504
    %v506 = vrot.slane %v438, %v505
    %v508 = vadd.f32 %v498, %v506
    %v509 = vadd.f32 %v499, %v506
    %v510 = vadd.f32 %v500, %v506
    %v511 = vadd.f32 %v501, %v506
    %v512 = vadd.f32 %v185, %v508
    %v513 = vadd.f32 %v188, %v509
    %v514 = vadd.f32 %v193, %v510
    %v515 = vadd.f32 %v196, %v511
    %516 = vst.msk [vmem:[#allocation2] sm:$0xff] %vm143, %v512
    %517 = vst.msk [vmem:[#allocation2 + $0x8] sm:$0xff] %vm143, %v513
    %518 = vst.msk [vmem:[#allocation2 + $0x10] sm:$0xff] %vm143, %v514
    %519 = vst.msk [vmem:[#allocation2 + $0x18] sm:$0xff] %vm143, %v515
    // Predicated region
    $region38: #{tpu_custom_call.1} parent=1 // pred_check
      _
    $region39: #{tpu_custom_call.1} parent=1 // pred_check_branch
      %521 = sbr.rel (0) target = $region41
    $region40: #{tpu_custom_call.1} parent=1 // pred_region
      %s523 = ssub.s32 512, 512
      %524 = vsyncadd [#allocation3], %s523
      %s525 = sshll.u32 [#allocation2], 4
      %s526 = int_to_ptr.vmem [resolvable:$true] %s525
      %531 = dma.vmem_to_hbm [thread:$0]  %s526, 512, %s9, [#allocation3], 128, 128, 8
    $region41: #{tpu_custom_call.1} parent=1 // pred_fallthru
      _
    // Predicated region
    $region42: #{tpu_custom_call.1} parent=1 // pred_check
      _
    $region43: #{tpu_custom_call.1} parent=1 // pred_check_branch
      %533 = sbr.rel (0) target = $region45
    $region44: #{tpu_custom_call.1} parent=1 // pred_region
      %534 = dma.done [#allocation3], 512
    $region45: #{tpu_custom_call.1} parent=1 // pred_fallthru
      _
    %535 = vsyncpa [#allocation3], 1

</llo_original>
